<compile_context>
chip_gen: v7x
topology: tpu7x:2x2x1
jax: 0.10.0
libtpu: 0.0.40
codegen_flags: <defaults>
</compile_context>

<pallas_src>
import functools

import jax
import jax.numpy as jnp
from jax.experimental import pallas as pl
from jax.experimental.pallas import tpu as pltpu


LEAKY_SLOPE = 0.01   # nn.LeakyReLU default
BN_EPS = 1e-5        # nn.BatchNorm1d default


def _softplus(x):
    # Matches F.softplus (beta=1, threshold=20).
    return jnp.where(x > 20.0, x, jnp.log1p(jnp.exp(jnp.minimum(x, 20.0))))


def _param_net_kernel(num_hidden_layers, num_mixtures, compute_dtype, *refs):
    """refs = (x, w0..w_{L-1}, gamma_beta_packed[2L,H], head_w[H,Npad],
               head_b[1,Npad], out[B,Npad])"""
    x_ref = refs[0]
    w_refs = refs[1:1 + num_hidden_layers]
    gb_ref = refs[1 + num_hidden_layers]
    hw_ref = refs[2 + num_hidden_layers]
    hb_ref = refs[3 + num_hidden_layers]
    out_ref = refs[4 + num_hidden_layers]

    batch = x_ref.shape[0]
    inv_b = 1.0 / float(batch)

    h = x_ref[...].astype(jnp.float32)

    # ---- feature_net: L x (Linear -> BatchNorm1d (train stats) -> LeakyReLU)
    for l in range(num_hidden_layers):
        # Linear with pre-transposed weight [in, out].  The Linear bias is
        # omitted: training-mode BN mean subtraction cancels it exactly.
        lhs = h if compute_dtype == jnp.float32 else h.astype(compute_dtype)
        h = jnp.dot(lhs, w_refs[l][...], preferred_element_type=jnp.float32)
        hidden = h.shape[1]

        # One cross-sublane reduction for both batch statistics.
        stats = jnp.sum(jnp.concatenate([h, h * h], axis=1),
                        axis=0, keepdims=True) * inv_b          # [1, 2H]
        mean = stats[:, :hidden]
        mean_sq = stats[:, hidden:]
        var = jnp.maximum(mean_sq - mean * mean, 0.0)

        # Fold BN into a single scale/shift: h*a + b.
        gamma = gb_ref[2 * l:2 * l + 1, :]      # [1, H]
        beta = gb_ref[2 * l + 1:2 * l + 2, :]   # [1, H]
        a = gamma * jax.lax.rsqrt(var + BN_EPS)
        b = beta - mean * a
        h = h * a + b

        # LeakyReLU (valid for 0 < slope < 1).
        h = jnp.maximum(h, LEAKY_SLOPE * h)

    # ---- fused heads: one lane-dense matmul, columns = [shape | scale | mix | pad]
    lhs = h if compute_dtype == jnp.float32 else h.astype(compute_dtype)
    out = jnp.dot(lhs, hw_ref[...], preferred_element_type=jnp.float32)
    out = out + hb_ref[...]

    # softplus(.) + 0.01 on the shape/scale columns, raw logits elsewhere.
    col = jax.lax.broadcasted_iota(jnp.int32, out.shape, 1)
    sp = _softplus(out) + 0.01
    out_ref[...] = jnp.where(col < 2 * num_mixtures, sp, out)


# ---------------------------------------------------------------------------
# One-time parameter preparation (hoisted out of the per-call path).
# ---------------------------------------------------------------------------
def prepare_params(params, num_hidden_layers, compute_dtype=jnp.float32):
    """Pre-transpose / pack / pad the module parameters once.

    Returns a dict of device arrays + static metadata that can be reused on
    every forward call without re-running any layout plumbing HLOs.
    """
    M, H = params["shape_w"].shape            # [num_mixtures, intermediate_size]
    n_fused = 3 * M
    n_pad = pl.cdiv(n_fused, 128) * 128        # lane-dense output width

    ws = tuple(jnp.transpose(params[f"w{l}"]).astype(compute_dtype)   # [in, out]
               for l in range(num_hidden_layers))

    gb_rows = []
    for l in range(num_hidden_layers):
        gb_rows.append(params[f"gamma{l}"])
        gb_rows.append(params[f"beta{l}"])
    gb = jnp.stack(gb_rows, axis=0).astype(jnp.float32)                # [2L, H]

    head_w = jnp.concatenate(
        [params["shape_w"], params["scale_w"], params["mix_w"]], axis=0)  # [3M, H]
    head_w = jnp.transpose(head_w)                                         # [H, 3M]
    head_w = jnp.pad(head_w, ((0, 0), (0, n_pad - n_fused))).astype(compute_dtype)

    head_b = jnp.concatenate(
        [params["shape_b"], params["scale_b"], params["mix_b"]], axis=0)   # [3M]
    head_b = jnp.pad(head_b, (0, n_pad - n_fused)).reshape(1, n_pad)
    head_b = head_b.astype(jnp.float32)

    return {
        "ws": ws, "gb": gb, "head_w": head_w, "head_b": head_b,
        "num_mixtures": int(M), "n_pad": int(n_pad),
        "compute_dtype": compute_dtype,
    }


@functools.partial(
    jax.jit,
    static_argnames=("num_hidden_layers", "num_mixtures", "n_pad",
                     "num_events", "compute_dtype"))
def _forward_impl(x, ws, gb, head_w, head_b, *, num_hidden_layers,
                  num_mixtures, n_pad, num_events, compute_dtype):
    B = x.shape[0]
    args = (x,) + tuple(ws) + (gb, head_w, head_b)

    flops = 0
    for w in ws:
        flops += 2 * B * int(w.shape[0]) * int(w.shape[1])
    flops += 2 * B * int(head_w.shape[0]) * int(head_w.shape[1])
    bytes_accessed = sum(int(a.size) * a.dtype.itemsize for a in args) + B * n_pad * 4
    cost = pl.CostEstimate(flops=int(flops),
                           transcendentals=int(2 * B * n_pad),
                           bytes_accessed=int(bytes_accessed))

    kernel = functools.partial(_param_net_kernel, num_hidden_layers,
                               num_mixtures, compute_dtype)

    # Small problem: single kernel invocation, every operand is a full-array
    # VMEM block (block_shape == array shape satisfies the (8,128) rule).
    out = pl.pallas_call(
        kernel,
        out_shape=jax.ShapeDtypeStruct((B, n_pad), jnp.float32),
        in_specs=[pl.BlockSpec(memory_space=pltpu.VMEM) for _ in args],
        out_specs=pl.BlockSpec(memory_space=pltpu.VMEM),
        cost_estimate=cost,
    )(*args)

    M = num_mixtures
    shape_p = out[:, 0:M]
    scale_p = out[:, M:2 * M]
    logits_p = out[:, 2 * M:3 * M]
    if num_events == 1:
        shape_p = shape_p[:, None, :]
        scale_p = scale_p[:, None, :]
        logits_p = logits_p[:, None, :]
    return shape_p, scale_p, logits_p


def param_cause_specific_net_forward(x, prepared, num_hidden_layers, num_events=1):
    """x: [B, in_features] float32.  prepared: output of prepare_params()."""
    return _forward_impl(
        x, prepared["ws"], prepared["gb"], prepared["head_w"], prepared["head_b"],
        num_hidden_layers=num_hidden_layers,
        num_mixtures=prepared["num_mixtures"],
        n_pad=prepared["n_pad"],
        num_events=num_events,
        compute_dtype=prepared["compute_dtype"])


# ---------------------------------------------------------------------------
# Pure-JAX reference and synthetic parameter init (for testing only).
# ---------------------------------------------------------------------------
def _reference_forward(x, params, num_hidden_layers, num_events=1):
    """Pure-JAX reference mirroring the PyTorch module (training-mode BN)."""
    h = x
    for l in range(num_hidden_layers):
        h = h @ params[f"w{l}"].T + params[f"b{l}"]
        mu = jnp.mean(h, axis=0, keepdims=True)
        var = jnp.mean((h - mu) ** 2, axis=0, keepdims=True)
        h = (h - mu) / jnp.sqrt(var + BN_EPS)
        h = h * params[f"gamma{l}"] + params[f"beta{l}"]
        h = jnp.where(h > 0.0, h, LEAKY_SLOPE * h)
    shape_lin = h @ params["shape_w"].T + params["shape_b"]
    scale_lin = h @ params["scale_w"].T + params["scale_b"]
    logits = h @ params["mix_w"].T + params["mix_b"]
    shape_p = _softplus(shape_lin) + 0.01
    scale_p = _softplus(scale_lin) + 0.01
    if num_events == 1:
        shape_p = shape_p[:, None, :]
        scale_p = scale_p[:, None, :]
        logits = logits[:, None, :]
    return shape_p, scale_p, logits


def init_params(key, in_features, intermediate_size, num_hidden_layers, num_mixtures):
    """Deterministic synthetic parameters mirroring the module's __init__ shapes."""
    params = {}
    dims_in = [in_features] + [intermediate_size] * (num_hidden_layers - 1)
    for l in range(num_hidden_layers):
        key, k1, k2 = jax.random.split(key, 3)
        fan_in = dims_in[l]
        bound = 1.0 / jnp.sqrt(fan_in)
        params[f"w{l}"] = jax.random.uniform(
            k1, (intermediate_size, fan_in), jnp.float32, -bound, bound)
        params[f"b{l}"] = jax.random.uniform(
            k2, (intermediate_size,), jnp.float32, -bound, bound)
        params[f"gamma{l}"] = jnp.ones((intermediate_size,), jnp.float32)
        params[f"beta{l}"] = jnp.zeros((intermediate_size,), jnp.float32)
    for name in ("shape", "scale", "mix"):
        key, k1, k2 = jax.random.split(key, 3)
        bound = 1.0 / jnp.sqrt(intermediate_size)
        params[f"{name}_w"] = jax.random.uniform(
            k1, (num_mixtures, intermediate_size), jnp.float32, -bound, bound)
        params[f"{name}_b"] = jax.random.uniform(
            k2, (num_mixtures,), jnp.float32, -bound, bound)
    return params


if __name__ == "__main__":
    # Small, module-consistent shapes.
    batch = 8
    in_features = 16
    intermediate_size = 32
    num_hidden_layers = 2
    num_mixtures = 4
    num_events = 1

    key = jax.random.PRNGKey(0)
    key, kx = jax.random.split(key)
    x = jax.random.normal(kx, (batch, in_features), jnp.float32)

    params = init_params(key, in_features, intermediate_size,
                         num_hidden_layers, num_mixtures)
    ref = _reference_forward(x, params, num_hidden_layers, num_events=num_events)

    # --- default (f32) path: one-time prepare, then validated forward -------
    prep = prepare_params(params, num_hidden_layers, compute_dtype=jnp.float32)
    jax.block_until_ready((prep["ws"], prep["gb"], prep["head_w"], prep["head_b"]))

    out = param_cause_specific_net_forward(
        x, prep, num_hidden_layers, num_events=num_events)
    jax.block_until_ready(out)

    shape_p, scale_p, logits_p = out
    assert shape_p.shape == (batch, 1, num_mixtures)
    assert scale_p.shape == (batch, 1, num_mixtures)
    assert logits_p.shape == (batch, 1, num_mixtures)
    for got, want in zip(out, ref):
        assert got.shape == want.shape
        assert bool(jnp.all(jnp.isfinite(got)))
        max_err = float(jnp.max(jnp.abs(got - want)))
        assert max_err < 1e-3, f"f32 mismatch vs reference: {max_err}"
    # shape/scale are softplus(.) + 0.01 > 0.01
    assert bool(jnp.all(shape_p > 0.01)) and bool(jnp.all(scale_p > 0.01))

    # --- optional bf16 matmul path (looser tolerance) ------------------------
    prep_bf16 = prepare_params(params, num_hidden_layers, compute_dtype=jnp.bfloat16)
    out_bf16 = param_cause_specific_net_forward(
        x, prep_bf16, num_hidden_layers, num_events=num_events)
    jax.block_until_ready(out_bf16)
    for got, want in zip(out_bf16, ref):
        assert bool(jnp.all(jnp.isfinite(got)))
        max_err = float(jnp.max(jnp.abs(got - want)))
        assert max_err < 1e-1, f"bf16 mismatch vs reference: {max_err}"

    print("KERNEL_OK")
</pallas_src>

<mosaic_0001>
module attributes {stable_mosaic.version = 11 : i64} {
  func.func @_param_net_kernel(%arg0: memref<8x16xf32, #tpu.memory_space<vmem>>, %arg1: memref<16x32xf32, #tpu.memory_space<vmem>>, %arg2: memref<32x32xf32, #tpu.memory_space<vmem>>, %arg3: memref<4x32xf32, #tpu.memory_space<vmem>>, %arg4: memref<32x128xf32, #tpu.memory_space<vmem>>, %arg5: memref<1x128xf32, #tpu.memory_space<vmem>>, %arg6: memref<8x128xf32, #tpu.memory_space<vmem>>) attributes {dimension_semantics = [], scalar_prefetch = 0 : i64, scratch_operands = 0 : i64, tpu.core_type = #tpu.core_type<tc>} {
    %c0 = arith.constant 0 : index
    %c0_0 = arith.constant 0 : index
    %0 = vector.load %arg0[%c0, %c0_0] : memref<8x16xf32, #tpu.memory_space<vmem>>, vector<8x16xf32>
    %c0_1 = arith.constant 0 : index
    %c0_2 = arith.constant 0 : index
    %1 = vector.load %arg1[%c0_1, %c0_2] : memref<16x32xf32, #tpu.memory_space<vmem>>, vector<16x32xf32>
    %cst = arith.constant dense<0.000000e+00> : vector<8x32xf32>
    %2 = tpu.matmul %0, %1, %cst {dimension_numbers = #tpu.dot_dimension_numbers<[1], [0], [0], [1], [0, 0, 1, 1], [], []>} : vector<8x16xf32>, vector<16x32xf32>, vector<8x32xf32> -> vector<8x32xf32>
    %3 = arith.mulf %2, %2 : vector<8x32xf32>
    %4 = tpu.concatenate %2, %3 in 1 : vector<8x32xf32>, vector<8x32xf32> -> vector<8x64xf32>
    %cst_3 = arith.constant dense<0.000000e+00> : vector<64xf32>
    %5 = vector.multi_reduction <add>, %4, %cst_3 [0] : vector<8x64xf32> to vector<64xf32>
    %6 = vector.shape_cast %5 : vector<64xf32> to vector<1x64xf32>
    %cst_4 = arith.constant 1.250000e-01 : f32
    %7 = vector.broadcast %cst_4 : f32 to vector<1x64xf32>
    %8 = arith.mulf %6, %7 : vector<1x64xf32>
    %9 = vector.extract_strided_slice %8 {offsets = [0, 0], sizes = [1, 32], strides = [1, 1]} : vector<1x64xf32> to vector<1x32xf32>
    %10 = vector.extract_strided_slice %8 {offsets = [0, 32], sizes = [1, 32], strides = [1, 1]} : vector<1x64xf32> to vector<1x32xf32>
    %11 = arith.mulf %9, %9 : vector<1x32xf32>
    %12 = arith.subf %10, %11 : vector<1x32xf32>
    %cst_5 = arith.constant 0.000000e+00 : f32
    %13 = vector.broadcast %cst_5 : f32 to vector<1x32xf32>
    %14 = arith.maximumf %12, %13 : vector<1x32xf32>
    %c0_6 = arith.constant 0 : index
    %c0_7 = arith.constant 0 : index
    %15 = vector.load %arg3[%c0_6, %c0_7] : memref<4x32xf32, #tpu.memory_space<vmem>>, vector<1x32xf32>
    %c1 = arith.constant 1 : index
    %c0_8 = arith.constant 0 : index
    %16 = vector.load %arg3[%c1, %c0_8] : memref<4x32xf32, #tpu.memory_space<vmem>>, vector<1x32xf32>
    %cst_9 = arith.constant 9.99999974E-6 : f32
    %17 = vector.broadcast %cst_9 : f32 to vector<1x32xf32>
    %18 = arith.addf %14, %17 : vector<1x32xf32>
    %19 = math.rsqrt %18 : vector<1x32xf32>
    %20 = arith.mulf %15, %19 : vector<1x32xf32>
    %21 = arith.mulf %9, %20 : vector<1x32xf32>
    %22 = arith.subf %16, %21 : vector<1x32xf32>
    %23 = vector.broadcast %20 : vector<1x32xf32> to vector<8x32xf32>
    %24 = arith.mulf %2, %23 : vector<8x32xf32>
    %25 = vector.broadcast %22 : vector<1x32xf32> to vector<8x32xf32>
    %26 = arith.addf %24, %25 : vector<8x32xf32>
    %cst_10 = arith.constant 0.00999999977 : f32
    %27 = vector.broadcast %cst_10 : f32 to vector<8x32xf32>
    %28 = arith.mulf %27, %26 : vector<8x32xf32>
    %29 = arith.maximumf %26, %28 : vector<8x32xf32>
    %c0_11 = arith.constant 0 : index
    %c0_12 = arith.constant 0 : index
    %30 = vector.load %arg2[%c0_11, %c0_12] : memref<32x32xf32, #tpu.memory_space<vmem>>, vector<32x32xf32>
    %cst_13 = arith.constant dense<0.000000e+00> : vector<8x32xf32>
    %31 = tpu.matmul %29, %30, %cst_13 {dimension_numbers = #tpu.dot_dimension_numbers<[1], [0], [0], [1], [0, 0, 1, 1], [], []>} : vector<8x32xf32>, vector<32x32xf32>, vector<8x32xf32> -> vector<8x32xf32>
    %32 = arith.mulf %31, %31 : vector<8x32xf32>
    %33 = tpu.concatenate %31, %32 in 1 : vector<8x32xf32>, vector<8x32xf32> -> vector<8x64xf32>
    %cst_14 = arith.constant dense<0.000000e+00> : vector<64xf32>
    %34 = vector.multi_reduction <add>, %33, %cst_14 [0] : vector<8x64xf32> to vector<64xf32>
    %35 = vector.shape_cast %34 : vector<64xf32> to vector<1x64xf32>
    %cst_15 = arith.constant 1.250000e-01 : f32
    %36 = vector.broadcast %cst_15 : f32 to vector<1x64xf32>
    %37 = arith.mulf %35, %36 : vector<1x64xf32>
    %38 = vector.extract_strided_slice %37 {offsets = [0, 0], sizes = [1, 32], strides = [1, 1]} : vector<1x64xf32> to vector<1x32xf32>
    %39 = vector.extract_strided_slice %37 {offsets = [0, 32], sizes = [1, 32], strides = [1, 1]} : vector<1x64xf32> to vector<1x32xf32>
    %40 = arith.mulf %38, %38 : vector<1x32xf32>
    %41 = arith.subf %39, %40 : vector<1x32xf32>
    %cst_16 = arith.constant 0.000000e+00 : f32
    %42 = vector.broadcast %cst_16 : f32 to vector<1x32xf32>
    %43 = arith.maximumf %41, %42 : vector<1x32xf32>
    %c2 = arith.constant 2 : index
    %c0_17 = arith.constant 0 : index
    %44 = vector.load %arg3[%c2, %c0_17] : memref<4x32xf32, #tpu.memory_space<vmem>>, vector<1x32xf32>
    %c3 = arith.constant 3 : index
    %c0_18 = arith.constant 0 : index
    %45 = vector.load %arg3[%c3, %c0_18] : memref<4x32xf32, #tpu.memory_space<vmem>>, vector<1x32xf32>
    %cst_19 = arith.constant 9.99999974E-6 : f32
    %46 = vector.broadcast %cst_19 : f32 to vector<1x32xf32>
    %47 = arith.addf %43, %46 : vector<1x32xf32>
    %48 = math.rsqrt %47 : vector<1x32xf32>
    %49 = arith.mulf %44, %48 : vector<1x32xf32>
    %50 = arith.mulf %38, %49 : vector<1x32xf32>
    %51 = arith.subf %45, %50 : vector<1x32xf32>
    %52 = vector.broadcast %49 : vector<1x32xf32> to vector<8x32xf32>
    %53 = arith.mulf %31, %52 : vector<8x32xf32>
    %54 = vector.broadcast %51 : vector<1x32xf32> to vector<8x32xf32>
    %55 = arith.addf %53, %54 : vector<8x32xf32>
    %cst_20 = arith.constant 0.00999999977 : f32
    %56 = vector.broadcast %cst_20 : f32 to vector<8x32xf32>
    %57 = arith.mulf %56, %55 : vector<8x32xf32>
    %58 = arith.maximumf %55, %57 : vector<8x32xf32>
    %c0_21 = arith.constant 0 : index
    %c0_22 = arith.constant 0 : index
    %59 = vector.load %arg4[%c0_21, %c0_22] : memref<32x128xf32, #tpu.memory_space<vmem>>, vector<32x128xf32>
    %cst_23 = arith.constant dense<0.000000e+00> : vector<8x128xf32>
    %60 = tpu.matmul %58, %59, %cst_23 {dimension_numbers = #tpu.dot_dimension_numbers<[1], [0], [0], [1], [0, 0, 1, 1], [], []>} : vector<8x32xf32>, vector<32x128xf32>, vector<8x128xf32> -> vector<8x128xf32>
    %c0_24 = arith.constant 0 : index
    %c0_25 = arith.constant 0 : index
    %61 = vector.load %arg5[%c0_24, %c0_25] : memref<1x128xf32, #tpu.memory_space<vmem>>, vector<1x128xf32>
    %62 = vector.broadcast %61 : vector<1x128xf32> to vector<8x128xf32>
    %63 = arith.addf %60, %62 : vector<8x128xf32>
    %64 = tpu.iota {dimensions = array<i32: 1>} : vector<8x128xi32>
    %cst_26 = arith.constant 2.000000e+01 : f32
    %65 = vector.broadcast %cst_26 : f32 to vector<8x128xf32>
    %66 = arith.cmpf ogt, %63, %65 : vector<8x128xf32>
    %cst_27 = arith.constant 2.000000e+01 : f32
    %67 = vector.broadcast %cst_27 : f32 to vector<8x128xf32>
    %68 = arith.minimumf %63, %67 : vector<8x128xf32>
    %69 = math.exp %68 : vector<8x128xf32>
    %70 = math.log1p %69 : vector<8x128xf32>
    %71 = arith.select %66, %63, %70 : vector<8x128xi1>, vector<8x128xf32>
    %cst_28 = arith.constant 0.00999999977 : f32
    %72 = vector.broadcast %cst_28 : f32 to vector<8x128xf32>
    %73 = arith.addf %71, %72 : vector<8x128xf32>
    %c8_i32 = arith.constant 8 : i32
    %74 = vector.broadcast %c8_i32 : i32 to vector<8x128xi32>
    %75 = arith.cmpi slt, %64, %74 : vector<8x128xi32>
    %76 = arith.select %75, %73, %63 : vector<8x128xi1>, vector<8x128xf32>
    %c0_29 = arith.constant 0 : index
    %c0_30 = arith.constant 0 : index
    %77 = vector.load %arg6[%c0_29, %c0_30] : memref<8x128xf32, #tpu.memory_space<vmem>>, vector<8x128xf32>
    tpu.vector_store %arg6[%c0_29, %c0_30], %76 {strides = array<i32>} : memref<8x128xf32, #tpu.memory_space<vmem>>, vector<8x128xf32>,
    return
  }
}

</mosaic_0001>

<llo_original>
// kernel: _forward_impl.1
$region0: #{_forward_impl.1}
  #allocation0 [shape = 'u32[]', space=smem, size = 0x4, offset = 0x4, fixed_abs, tag = 'smem constant byte address 0x4 - core index']
  #allocation1 [shape = 'u32[144,128]{1,0:T(1,128)}', space=vmem, size = 0x12000, scoped, tag = 'internal scratch']
  %s0 = inlined_call_operand.hbm [shape: f32[8,16], index: 0, kind: input, shape index: {}]
  %s1 = inlined_call_operand.hbm [shape: f32[16,32], index: 1, kind: input, shape index: {}]
  %s2 = inlined_call_operand.hbm [shape: f32[32,32], index: 2, kind: input, shape index: {}]
  %s3 = inlined_call_operand.vmem [shape: f32[4,32], index: 3, kind: input, shape index: {}]
  %s4 = inlined_call_operand.hbm [shape: f32[32,128], index: 4, kind: input, shape index: {}]
  %s5 = inlined_call_operand.vmem [shape: f32[1,128], index: 5, kind: input, shape index: {}]
  %s6 = inlined_call_operand.vmem [shape: f32[8,128], index: 6, kind: output, shape index: {}]
  %s7 = sld [smem:[#allocation0]]
  $region50: #{_forward_impl.1} parent=0
    _
  %s9 = ssub.s32 1, %s7
  %s10 = scalar_select 0, %s9, %s7
  $region1: #{_forward_impl.1} parent=0
    #allocation2 [shape = 'u8[4096]{0}', space=vmem, size = 0x1000, scoped, tag = 'input window, operand 0, single buffered']
    #allocation3 [shape = 's32[1]{0}', space=sflag, size = 0x4, scoped, tag = 'scoped memory for _forward_impl.1']
    #allocation4 [shape = 'u8[8192]{0}', space=vmem, size = 0x2000, scoped, tag = 'input window, operand 1, single buffered']
    #allocation5 [shape = 's32[1]{0}', space=sflag, size = 0x4, scoped, tag = 'scoped memory for _forward_impl.1']
    #allocation6 [shape = 'u8[16384]{0}', space=vmem, size = 0x4000, scoped, tag = 'input window, operand 2, single buffered']
    #allocation7 [shape = 'u8[16384]{0}', space=vmem, size = 0x4000, scoped, tag = 'input window, operand 4, single buffered']
    #allocation8 [shape = 's32[1]{0}', space=sflag, size = 0x4, scoped, tag = 'scoped memory for _forward_impl.1']
    %11 = vsyncpa [#allocation3], 0
    %12 = vsyncpa [#allocation5], 0
    %13 = vsyncpa [#allocation8], 0
    // Predicated region
    $region2: #{_forward_impl.1} parent=1 // pred_check
      _
    $region3: #{_forward_impl.1} parent=1 // pred_check_branch
      %15 = sbr.rel (0) target = $region5
    $region4: #{_forward_impl.1} parent=1 // pred_region
      %s17 = ssub.s32 128, 128
      %18 = vsyncadd [#allocation3], %s17
      %s20 = sshll.u32 [#allocation2], 4
      %s21 = int_to_ptr.vmem [resolvable:$true] %s20
      %23 = dma.hbm_to_vmem [thread:$0]  %s0, 128, %s21, [#allocation3]
    $region5: #{_forward_impl.1} parent=1 // pred_fallthru
      _
    // Predicated region
    $region6: #{_forward_impl.1} parent=1 // pred_check
      _
    $region7: #{_forward_impl.1} parent=1 // pred_check_branch
      %25 = sbr.rel (0) target = $region9
    $region8: #{_forward_impl.1} parent=1 // pred_region
      %s27 = ssub.s32 256, 256
      %28 = vsyncadd [#allocation5], %s27
      %s29 = sshll.u32 [#allocation4], 4
      %s30 = int_to_ptr.vmem [resolvable:$true] %s29
      %35 = dma.hbm_to_vmem [thread:$0]  %s1, 256, %s30, [#allocation5], 128, 128, 8
    $region9: #{_forward_impl.1} parent=1 // pred_fallthru
      _
    // Predicated region
    $region10: #{_forward_impl.1} parent=1 // pred_check
      _
    $region11: #{_forward_impl.1} parent=1 // pred_check_branch
      %37 = sbr.rel (0) target = $region13
    $region12: #{_forward_impl.1} parent=1 // pred_region
      %s39 = ssub.s32 512, 512
      %40 = vsyncadd [#allocation5], %s39
      %s41 = sshll.u32 [#allocation6], 4
      %s42 = int_to_ptr.vmem [resolvable:$true] %s41
      %47 = dma.hbm_to_vmem [thread:$0]  %s2, 512, %s42, [#allocation5], 128, 128, 8
    $region13: #{_forward_impl.1} parent=1 // pred_fallthru
      _
    // Predicated region
    $region14: #{_forward_impl.1} parent=1 // pred_check
      _
    $region15: #{_forward_impl.1} parent=1 // pred_check_branch
      %49 = sbr.rel (0) target = $region17
    $region16: #{_forward_impl.1} parent=1 // pred_region
      _
    $region17: #{_forward_impl.1} parent=1 // pred_fallthru
      _
    // Predicated region
    $region18: #{_forward_impl.1} parent=1 // pred_check
      _
    $region19: #{_forward_impl.1} parent=1 // pred_check_branch
      %51 = sbr.rel (0) target = $region21
    $region20: #{_forward_impl.1} parent=1 // pred_region
      %s53 = ssub.s32 512, 512
      %54 = vsyncadd [#allocation8], %s53
      %s55 = sshll.u32 [#allocation7], 4
      %s56 = int_to_ptr.vmem [resolvable:$true] %s55
      %61 = dma.hbm_to_vmem [thread:$0]  %s4, 512, %s56, [#allocation8], 128, 128, 8
    $region21: #{_forward_impl.1} parent=1 // pred_fallthru
      _
    // Predicated region
    $region22: #{_forward_impl.1} parent=1 // pred_check
      _
    $region23: #{_forward_impl.1} parent=1 // pred_check_branch
      %63 = sbr.rel (0) target = $region25
    $region24: #{_forward_impl.1} parent=1 // pred_region
      _
    $region25: #{_forward_impl.1} parent=1 // pred_fallthru
      _
    // Predicated region
    $region26: #{_forward_impl.1} parent=1 // pred_check
      _
    $region27: #{_forward_impl.1} parent=1 // pred_check_branch
      %65 = sbr.rel (0) target = $region29
    $region28: #{_forward_impl.1} parent=1 // pred_region
      %66 = dma.done [#allocation3], 128
    $region29: #{_forward_impl.1} parent=1 // pred_fallthru
      _
    // Predicated region
    $region30: #{_forward_impl.1} parent=1 // pred_check
      _
    $region31: #{_forward_impl.1} parent=1 // pred_check_branch
      %68 = sbr.rel (0) target = $region33
    $region32: #{_forward_impl.1} parent=1 // pred_region
      %69 = dma.done [#allocation5], 256
    $region33: #{_forward_impl.1} parent=1 // pred_fallthru
      _
    // Predicated region
    $region34: #{_forward_impl.1} parent=1 // pred_check
      _
    $region35: #{_forward_impl.1} parent=1 // pred_check_branch
      %71 = sbr.rel (0) target = $region37
    $region36: #{_forward_impl.1} parent=1 // pred_region
      %72 = dma.done [#allocation5], 512
    $region37: #{_forward_impl.1} parent=1 // pred_fallthru
      _
    // Predicated region
    $region38: #{_forward_impl.1} parent=1 // pred_check
      _
    $region39: #{_forward_impl.1} parent=1 // pred_check_branch
      %74 = sbr.rel (0) target = $region41
    $region40: #{_forward_impl.1} parent=1 // pred_region
      %75 = dma.done [#allocation8], 512
    $region41: #{_forward_impl.1} parent=1 // pred_fallthru
      _
    %v76 = vld [vmem:[#allocation2] sm:$0xff]
    %v77 = vld [vmem:[#allocation4] sm:$0xff]
    %v78 = vld [vmem:[#allocation4 + $0x8] sm:$0xff]
    %vm79 = vcmask 130048
    %v81 = vsel %vm79, %v76, 0
    %83 = vmatprep.subr.mxu0 0.0
    %84 = vmatpush1.msra.mxu0 %v77
    %85 = vmatprep.subr.mxu0 0.0
    %86 = vmatpush1.msra.mxu0 %v78
    %87 = vmatprep.subr.mxu0 0.0
    %88 = vmatpush1.msra.mxu0 0.0
    %89 = vmatprep.subr.mxu0 0.0
    %90 = vmatpush1.msra.mxu0 0.0
    %91 = vmatprep.subr.mxu0 0.0
    %92 = vmatpush1.msra.mxu0 0.0
    %93 = vmatprep.subr.mxu0 0.0
    %94 = vmatpush1.msra.mxu0 0.0
    %95 = vmatprep.subr.mxu0 0.0
    %96 = vmatpush1.msra.mxu0 0.0
    %97 = vmatprep.subr.mxu0 0.0
    %98 = vmatpush1.msra.mxu0 0.0
    %99 = vmatprep.subr.mxu0 0.0
    %100 = vmatpush1.msra.mxu0 0.0
    %101 = vmatprep.subr.mxu0 0.0
    %102 = vmatpush1.msra.mxu0 0.0
    %103 = vmatprep.subr.mxu0 0.0
    %104 = vmatpush1.msra.mxu0 0.0
    %105 = vmatprep.subr.mxu0 0.0
    %106 = vmatpush1.msra.mxu0 0.0
    %107 = vmatprep.subr.mxu0 0.0
    %108 = vmatpush1.msra.mxu0 0.0
    %109 = vmatprep.subr.mxu0 0.0
    %110 = vmatpush1.msra.mxu0 0.0
    %111 = vmatprep.subr.mxu0 0.0
    %112 = vmatpush1.msra.mxu0 0.0
    %113 = vmatprep.subr.mxu0 0.0
    %114 = vmatpush1.msra.mxu0 0.0
    %115 = vmatprep.subr.mxu0 0.0
    %116 = vmatpush1.msra.mxu0 0.0
    %117 = vmatprep.subr.mxu0 0.0
    %118 = vmatpush1.msra.mxu0 0.0
    %119 = vmatprep.subr.mxu0 0.0
    %120 = vmatpush1.msra.mxu0 0.0
    %121 = vmatprep.subr.mxu0 0.0
    %122 = vmatpush1.msra.mxu0 0.0
    %123 = vmatprep.subr.mxu0 0.0
    %124 = vmatpush1.msra.mxu0 0.0
    %125 = vmatprep.subr.mxu0 0.0
    %126 = vmatpush1.msra.mxu0 0.0
    %127 = vmatprep.subr.mxu0 0.0
    %128 = vmatpush1.msra.mxu0 0.0
    %129 = vmatprep.subr.mxu0 0.0
    %130 = vmatpush1.msra.mxu0 0.0
    %131 = vmatprep.subr.mxu0 0.0
    %132 = vmatpush1.msra.mxu0 0.0
    %133 = vmatprep.subr.mxu0 0.0
    %134 = vmatpush1.msra.mxu0 0.0
    %135 = vmatprep.subr.mxu0 0.0
    %136 = vmatpush1.msra.mxu0 0.0
    %137 = vmatprep.subr.mxu0 0.0
    %138 = vmatpush1.msra.mxu0 0.0
    %139 = vmatprep.subr.mxu0 0.0
    %140 = vmatpush1.msra.mxu0 0.0
    %141 = vmatprep.subr.mxu0 0.0
    %142 = vmatpush1.msra.mxu0 0.0
    %143 = vmatprep.subr.mxu0 0.0
    %144 = vmatpush1.msra.mxu0 0.0
    %145 = vmatprep.subr.mxu0 0.0
    %146 = vmatpush1.msra.mxu0 0.0
    %147 = vmatprep.mubr.f32.mxu0 0.0
    %148 = vmatmul.mubr.f32.gmra.mrb[0].mxu0 %v81
    %v149 = vpop.f32.mrb[0].mxu0
    %v150 = vadd.f32 0.0, %v149
    %v151 = vpop.f32.mrb[0].mxu0
    %152 = vdwg.mxu0
    %v153 = vmul.f32 %v150, %v150
    %155 = vrot.lane.b32.xlu0 %v153, 32
    %v156 = vpop.permute.xlu0 %155
    %vm158 = vcmask 261120
    %v159 = vsel %vm158, %v150, %v156
    %vm160 = vcmask 523264
    %v161 = vsel %vm160, %v159, 0.0
    %v162 = vrot.slane %v161, 4
    %v163 = vadd.f32 %v161, %v162
    %v164 = vrot.slane %v163, 2
    %v165 = vadd.f32 %v163, %v164
    %v166 = vrot.slane %v165, 1
    %v167 = vadd.f32 %v165, %v166
    %v168 = vmul.f32 %v167, 0.125
    %v169 = vmul.f32 %v168, %v168
    %171 = vrot.lane.b32.xlu0 %v169, 32
    %v172 = vpop.permute.xlu0 %171
    %v174 = vsub.f32 %v168, %v172
    %v175 = vmax.f32 %v174, 0.0
    %v176 = vld [vmem:[%s3] sm:$0x1]
    %v177 = vld [vmem:[%s3 + $0x1] sm:$0x1]
    %v178 = vadd.f32 %v175, 1e-05
    %v179 = vrsqrt.pop %v178
    %181 = vrot.lane.b32.xlu0 %v179, 96
    %v182 = vpop.permute.xlu0 %181
    %v184 = vmul.f32 %v176, %v182
    %v185 = vmul.f32 %v168, %v184
    %v186 = vsub.f32 %v177, %v185
    %v187 = vlaneseq
    %v188 = vshrl.u32 %v187, 7
    %v189 = vsub.s32 0, %v188
    %v190 = vrot.slane %v184, %v189
    %v191 = vmul.f32 %v150, %v190
    %v192 = vlaneseq
    %v193 = vshrl.u32 %v192, 7
    %v194 = vsub.s32 0, %v193
    %v195 = vrot.slane %v186, %v194
    %v196 = vadd.f32 %v191, %v195
    %v197 = vmul.f32 %v196, 0.01
    %v198 = vmax.f32 %v196, %v197
    %v199 = vld [vmem:[#allocation6] sm:$0xff]
    %v200 = vld [vmem:[#allocation6 + $0x8] sm:$0xff]
    %v201 = vld [vmem:[#allocation6 + $0x10] sm:$0xff]
    %v202 = vld [vmem:[#allocation6 + $0x18] sm:$0xff]
    %v204 = vsel %vm158, %v198, 0
    %206 = vmatprep.subr.mxu0 0.0
    %207 = vmatpush1.msra.mxu0 %v199
    %208 = vmatprep.subr.mxu0 0.0
    %209 = vmatpush1.msra.mxu0 %v200
    %210 = vmatprep.subr.mxu0 0.0
    %211 = vmatpush1.msra.mxu0 %v201
    %212 = vmatprep.subr.mxu0 0.0
    %213 = vmatpush1.msra.mxu0 %v202
    %214 = vmatprep.subr.mxu0 0.0
    %215 = vmatpush1.msra.mxu0 0.0
    %216 = vmatprep.subr.mxu0 0.0
    %217 = vmatpush1.msra.mxu0 0.0
    %218 = vmatprep.subr.mxu0 0.0
    %219 = vmatpush1.msra.mxu0 0.0
    %220 = vmatprep.subr.mxu0 0.0
    %221 = vmatpush1.msra.mxu0 0.0
    %222 = vmatprep.subr.mxu0 0.0
    %223 = vmatpush1.msra.mxu0 0.0
    %224 = vmatprep.subr.mxu0 0.0
    %225 = vmatpush1.msra.mxu0 0.0
    %226 = vmatprep.subr.mxu0 0.0
    %227 = vmatpush1.msra.mxu0 0.0
    %228 = vmatprep.subr.mxu0 0.0
    %229 = vmatpush1.msra.mxu0 0.0
    %230 = vmatprep.subr.mxu0 0.0
    %231 = vmatpush1.msra.mxu0 0.0
    %232 = vmatprep.subr.mxu0 0.0
    %233 = vmatpush1.msra.mxu0 0.0
    %234 = vmatprep.subr.mxu0 0.0
    %235 = vmatpush1.msra.mxu0 0.0
    %236 = vmatprep.subr.mxu0 0.0
    %237 = vmatpush1.msra.mxu0 0.0
    %238 = vmatprep.subr.mxu0 0.0
    %239 = vmatpush1.msra.mxu0 0.0
    %240 = vmatprep.subr.mxu0 0.0
    %241 = vmatpush1.msra.mxu0 0.0
    %242 = vmatprep.subr.mxu0 0.0
    %243 = vmatpush1.msra.mxu0 0.0
    %244 = vmatprep.subr.mxu0 0.0
    %245 = vmatpush1.msra.mxu0 0.0
    %246 = vmatprep.subr.mxu0 0.0
    %247 = vmatpush1.msra.mxu0 0.0
    %248 = vmatprep.subr.mxu0 0.0
    %249 = vmatpush1.msra.mxu0 0.0
    %250 = vmatprep.subr.mxu0 0.0
    %251 = vmatpush1.msra.mxu0 0.0
    %252 = vmatprep.subr.mxu0 0.0
    %253 = vmatpush1.msra.mxu0 0.0
    %254 = vmatprep.subr.mxu0 0.0
    %255 = vmatpush1.msra.mxu0 0.0
    %256 = vmatprep.subr.mxu0 0.0
    %257 = vmatpush1.msra.mxu0 0.0
    %258 = vmatprep.subr.mxu0 0.0
    %259 = vmatpush1.msra.mxu0 0.0
    %260 = vmatprep.subr.mxu0 0.0
    %261 = vmatpush1.msra.mxu0 0.0
    %262 = vmatprep.subr.mxu0 0.0
    %263 = vmatpush1.msra.mxu0 0.0
    %264 = vmatprep.subr.mxu0 0.0
    %265 = vmatpush1.msra.mxu0 0.0
    %266 = vmatprep.subr.mxu0 0.0
    %267 = vmatpush1.msra.mxu0 0.0
    %268 = vmatprep.subr.mxu0 0.0
    %269 = vmatpush1.msra.mxu0 0.0
    %270 = vmatprep.mubr.f32.mxu0 0.0
    %271 = vmatmul.mubr.f32.gmra.mrb[0].mxu0 %v204
    %v272 = vpop.f32.mrb[0].mxu0
    %v273 = vadd.f32 0.0, %v272
    %v274 = vpop.f32.mrb[0].mxu0
    %275 = vdwg.mxu0
    %v276 = vmul.f32 %v273, %v273
    %278 = vrot.lane.b32.xlu0 %v276, 32
    %v279 = vpop.permute.xlu0 %278
    %v281 = vsel %vm158, %v273, %v279
    %v282 = vsel %vm160, %v281, 0.0
    %v283 = vrot.slane %v282, 4
    %v284 = vadd.f32 %v282, %v283
    %v285 = vrot.slane %v284, 2
    %v286 = vadd.f32 %v284, %v285
    %v287 = vrot.slane %v286, 1
    %v288 = vadd.f32 %v286, %v287
    %v289 = vmul.f32 %v288, 0.125
    %v290 = vmul.f32 %v289, %v289
    %292 = vrot.lane.b32.xlu0 %v290, 32
    %v293 = vpop.permute.xlu0 %292
    %v295 = vsub.f32 %v289, %v293
    %v296 = vmax.f32 %v295, 0.0
    %v297 = vld [vmem:[%s3 + $0x2] sm:$0x1]
    %v298 = vld [vmem:[%s3 + $0x3] sm:$0x1]
    %v299 = vadd.f32 %v296, 1e-05
    %v300 = vrsqrt.pop %v299
    %302 = vrot.lane.b32.xlu0 %v300, 96
    %v303 = vpop.permute.xlu0 %302
    %v305 = vmul.f32 %v297, %v303
    %v306 = vmul.f32 %v289, %v305
    %v307 = vsub.f32 %v298, %v306
    %v308 = vlaneseq
    %v309 = vshrl.u32 %v308, 7
    %v310 = vsub.s32 0, %v309
    %v311 = vrot.slane %v305, %v310
    %v312 = vmul.f32 %v273, %v311
    %v313 = vlaneseq
    %v314 = vshrl.u32 %v313, 7
    %v315 = vsub.s32 0, %v314
    %v316 = vrot.slane %v307, %v315
    %v317 = vadd.f32 %v312, %v316
    %v318 = vmul.f32 %v317, 0.01
    %v319 = vmax.f32 %v317, %v318
    %v320 = vld [vmem:[#allocation7] sm:$0xff]
    %v321 = vld [vmem:[#allocation7 + $0x8] sm:$0xff]
    %v322 = vld [vmem:[#allocation7 + $0x10] sm:$0xff]
    %v323 = vld [vmem:[#allocation7 + $0x18] sm:$0xff]
    %v324 = vld [vmem:[%s5] sm:$0x1]
    %v326 = vlaneseq
    %v327 = vshrl.u32 %v326, 7
    %v328 = vsub.s32 0, %v327
    %v329 = vrot.slane %v324, %v328
    %v332 = vsel %vm158, %v319, 0
    %334 = vmatprep.subr.mxu0 0.0
    %335 = vmatpush1.msra.mxu0 %v320
    %336 = vmatprep.subr.mxu0 0.0
    %337 = vmatpush1.msra.mxu0 %v321
    %338 = vmatprep.subr.mxu0 0.0
    %339 = vmatpush1.msra.mxu0 %v322
    %340 = vmatprep.subr.mxu0 0.0
    %341 = vmatpush1.msra.mxu0 %v323
    %342 = vmatprep.subr.mxu0 0.0
    %343 = vmatpush1.msra.mxu0 0.0
    %344 = vmatprep.subr.mxu0 0.0
    %345 = vmatpush1.msra.mxu0 0.0
    %346 = vmatprep.subr.mxu0 0.0
    %347 = vmatpush1.msra.mxu0 0.0
    %348 = vmatprep.subr.mxu0 0.0
    %349 = vmatpush1.msra.mxu0 0.0
    %350 = vmatprep.subr.mxu0 0.0
    %351 = vmatpush1.msra.mxu0 0.0
    %352 = vmatprep.subr.mxu0 0.0
    %353 = vmatpush1.msra.mxu0 0.0
    %354 = vmatprep.subr.mxu0 0.0
    %355 = vmatpush1.msra.mxu0 0.0
    %356 = vmatprep.subr.mxu0 0.0
    %357 = vmatpush1.msra.mxu0 0.0
    %358 = vmatprep.subr.mxu0 0.0
    %359 = vmatpush1.msra.mxu0 0.0
    %360 = vmatprep.subr.mxu0 0.0
    %361 = vmatpush1.msra.mxu0 0.0
    %362 = vmatprep.subr.mxu0 0.0
    %363 = vmatpush1.msra.mxu0 0.0
    %364 = vmatprep.subr.mxu0 0.0
    %365 = vmatpush1.msra.mxu0 0.0
    %366 = vmatprep.subr.mxu0 0.0
    %367 = vmatpush1.msra.mxu0 0.0
    %368 = vmatprep.subr.mxu0 0.0
    %369 = vmatpush1.msra.mxu0 0.0
    %370 = vmatprep.subr.mxu0 0.0
    %371 = vmatpush1.msra.mxu0 0.0
    %372 = vmatprep.subr.mxu0 0.0
    %373 = vmatpush1.msra.mxu0 0.0
    %374 = vmatprep.subr.mxu0 0.0
    %375 = vmatpush1.msra.mxu0 0.0
    %376 = vmatprep.subr.mxu0 0.0
    %377 = vmatpush1.msra.mxu0 0.0
    %378 = vmatprep.subr.mxu0 0.0
    %379 = vmatpush1.msra.mxu0 0.0
    %380 = vmatprep.subr.mxu0 0.0
    %381 = vmatpush1.msra.mxu0 0.0
    %382 = vmatprep.subr.mxu0 0.0
    %383 = vmatpush1.msra.mxu0 0.0
    %384 = vmatprep.subr.mxu0 0.0
    %385 = vmatpush1.msra.mxu0 0.0
    %386 = vmatprep.subr.mxu0 0.0
    %387 = vmatpush1.msra.mxu0 0.0
    %388 = vmatprep.subr.mxu0 0.0
    %389 = vmatpush1.msra.mxu0 0.0
    %390 = vmatprep.subr.mxu0 0.0
    %391 = vmatpush1.msra.mxu0 0.0
    %392 = vmatprep.subr.mxu0 0.0
    %393 = vmatpush1.msra.mxu0 0.0
    %394 = vmatprep.subr.mxu0 0.0
    %395 = vmatpush1.msra.mxu0 0.0
    %396 = vmatprep.subr.mxu0 0.0
    %397 = vmatpush1.msra.mxu0 0.0
    %398 = vmatprep.mubr.f32.mxu0 0.0
    %399 = vmatmul.mubr.f32.gmra.mrb[0].mxu0 %v332
    %v400 = vpop.f32.mrb[0].mxu0
    %v401 = vadd.f32 %v329, %v400
    %v402 = vpop.f32.mrb[0].mxu0
    %403 = vdwg.mxu0
    %v404 = vlaneseq
    %v405 = vand.u32 %v404, 127
    %vm406 = vcmp.gt.f32.partialorder %v401, 20.0
    %v407 = vmin.f32 %v401, 20.0
    %v408 = vmul.f32 %v407, 1.442695
    %v409 = vpow.pop %v408
    %v410 = vadd.f32 %v409, 1.0
    %v411 = vlog2.pop %v410
    %v412 = vmul.f32 %v411, 0.6931472
    %v413 = vmul.f32 -0.5, %v409
    %v414 = vadd.f32 %v413, 1.0
    %v415 = vmul.f32 %v414, %v409
    %v416 = vand.u32 2147483647, %v409
    %vm417 = vcmp.lt.f32.partialorder %v416, 0.0004427343
    %v418 = vsel %vm417, %v415, %v412
    %v419 = vsel %vm406, %v401, %v418
    %v420 = vadd.f32 %v419, 0.01
    %vm421 = vcmp.lt.s32.totalorder %v405, 8
    %v422 = vsel %vm421, %v420, %v401
    %423 = vst [vmem:[%s6] sm:$0xff] %v422
    // Predicated region
    $region42: #{_forward_impl.1} parent=1 // pred_check
      _
    $region43: #{_forward_impl.1} parent=1 // pred_check_branch
      %425 = sbr.rel (0) target = $region45
    $region44: #{_forward_impl.1} parent=1 // pred_region
      _
    $region45: #{_forward_impl.1} parent=1 // pred_fallthru
      _
    // Predicated region
    $region46: #{_forward_impl.1} parent=1 // pred_check
      _
    $region47: #{_forward_impl.1} parent=1 // pred_check_branch
      %427 = sbr.rel (0) target = $region49
    $region48: #{_forward_impl.1} parent=1 // pred_region
      _
    $region49: #{_forward_impl.1} parent=1 // pred_fallthru
      _
    %428 = vsyncpa [#allocation3], 1
    %429 = vsyncpa [#allocation5], 1
    %430 = vsyncpa [#allocation8], 1

</llo_original>
